<compile_context>
chip_gen: v7x
topology: tpu7x:2x2x1
jax: 0.10.0
libtpu: 0.0.40
codegen_flags: <defaults>
</compile_context>

<pallas_src>
import functools

import jax
import jax.numpy as jnp
from jax.experimental import pallas as pl
from jax.experimental.pallas import tpu as pltpu


def _concat_linear_kernel(use_bf16_matmul, x_ref, w_ref, bias_ref, out_ref):
    x = x_ref[0]               # (TILE_N, dim_in)
    w = w_ref[...]             # (dim_in, dim_out), VMEM-resident across grid
    if use_bf16_matmul:
        x = x.astype(jnp.bfloat16)
        w = w.astype(jnp.bfloat16)
    h = jnp.dot(x, w, preferred_element_type=jnp.float32)   # (TILE_N, dim_out)
    h = h + bias_ref[0]        # (1, dim_out) broadcasts over the row tile
    out_ref[0] = h.astype(out_ref.dtype)


def _pick_tile(n):
    # Largest 8-aligned tile (<=512 rows) that divides the point axis; a tile
    # equal to the full axis also satisfies the (8, 128) block-shape rule.
    for t in (512, 256, 128, 64, 32, 16, 8):
        if n % t == 0:
            return t
    return n


def concat_linear_v2_forward(context, x, W, b, Wh, *, use_bf16_matmul=False):
    """Pallas-backed ConcatLinear_v2 forward.

    context: (B, 1 + dim_c) float32
    x:       (B, N, dim_in) float32   (2-D (B, dim_in) also accepted)
    W, b:    _layer weights,      W: (dim_out, dim_in),      b: (dim_out,)
    Wh:      _hyper_bias weights, Wh: (dim_out, 1 + dim_c)   (no bias term)
    """
    squeeze = False
    if x.ndim == 2:
        x = x[:, None, :]
        squeeze = True

    B, N, dim_in = x.shape
    dim_out = W.shape[0]

    # Hoisted per-batch term: hyper-bias + layer bias. This is a tiny
    # (B, 1+dim_c) @ (1+dim_c, dim_out) matmul — keeping it out of the kernel
    # removes an M=1 MXU push and a VPU add from every grid step.
    ctx_bias = (context.astype(jnp.float32) @ Wh.T.astype(jnp.float32)
                + b.astype(jnp.float32)).reshape(B, 1, dim_out)

    Wt = W.T                                    # (dim_in, dim_out)
    if use_bf16_matmul:
        Wt = Wt.astype(jnp.bfloat16)            # bf16 operands, f32 accumulate

    tile_n = _pick_tile(N)
    grid = (B, N // tile_n)

    kernel = functools.partial(_concat_linear_kernel, use_bf16_matmul)
    out = pl.pallas_call(
        kernel,
        out_shape=jax.ShapeDtypeStruct((B, N, dim_out), x.dtype),
        grid_spec=pltpu.PrefetchScalarGridSpec(
            num_scalar_prefetch=0,
            grid=grid,
            in_specs=[
                # per-(batch, point-tile) activation block
                pl.BlockSpec((1, tile_n, dim_in), lambda bi, ni: (bi, ni, 0)),
                # weight slab, constant index map -> resident in VMEM
                pl.BlockSpec((dim_in, dim_out), lambda bi, ni: (0, 0)),
                # per-batch fused bias row
                pl.BlockSpec((1, 1, dim_out), lambda bi, ni: (bi, 0, 0)),
            ],
            out_specs=pl.BlockSpec((1, tile_n, dim_out),
                                   lambda bi, ni: (bi, ni, 0)),
        ),
        compiler_params=pltpu.CompilerParams(
            dimension_semantics=("parallel", "parallel")),
    )(x, Wt, ctx_bias)

    if squeeze:
        out = out[:, 0, :]
    return out


def concat_linear_v2_reference(context, x, W, b, Wh):
    """Pure-JAX mirror of the PyTorch forward."""
    bias = context @ Wh.T                 # (B, dim_out)
    out = x @ W.T + b
    if x.ndim == 3:
        bias = bias[:, None, :]
    return out + bias


if __name__ == "__main__":
    # Shapes consistent with PointFlow's use of ConcatLinear_v2:
    #   x = (batch, num_points, point_dim), context = (batch, 1 + dim_c)
    B, N, dim_in, dim_out, dim_c = 2, 512, 3, 32, 4

    key = jax.random.PRNGKey(0)
    k_ctx, k_x, k_w, k_b, k_wh = jax.random.split(key, 5)

    context = jax.random.normal(k_ctx, (B, 1 + dim_c), dtype=jnp.float32)
    x = jax.random.normal(k_x, (B, N, dim_in), dtype=jnp.float32)

    # nn.Linear-style deterministic init.
    bound = 1.0 / (dim_in ** 0.5)
    W = jax.random.uniform(k_w, (dim_out, dim_in), jnp.float32, -bound, bound)
    b = jax.random.uniform(k_b, (dim_out,), jnp.float32, -bound, bound)
    hbound = 1.0 / ((1 + dim_c) ** 0.5)
    Wh = jax.random.uniform(k_wh, (dim_out, 1 + dim_c), jnp.float32,
                            -hbound, hbound)

    out = concat_linear_v2_forward(context, x, W, b, Wh)
    out = jax.block_until_ready(out)

    ref = concat_linear_v2_reference(context, x, W, b, Wh)
    assert out.shape == (B, N, dim_out)
    assert jnp.allclose(out, ref, atol=1e-5, rtol=1e-5), "mismatch vs reference"

    print("KERNEL_OK")
</pallas_src>

<mosaic_0001>
module attributes {stable_mosaic.version = 11 : i64} {
  func.func @_concat_linear_kernel(%arg0: i32, %arg1: i32, %arg2: memref<1x512x3xf32, #tpu.memory_space<vmem>>, %arg3: memref<3x32xf32, #tpu.memory_space<vmem>>, %arg4: memref<1x1x32xf32, #tpu.memory_space<vmem>>, %arg5: memref<1x512x32xf32, #tpu.memory_space<vmem>>) attributes {dimension_semantics = [#tpu.dimension_semantics<parallel>, #tpu.dimension_semantics<parallel>], iteration_bounds = array<i64: 2, 1>, scalar_prefetch = 0 : i64, scratch_operands = 0 : i64, tpu.core_type = #tpu.core_type<tc>, window_params = [{transform_indices = @transform_0, window_bounds = array<i64: 1, 512, 3>}, {pipeline_mode = #tpu.pipeline_mode<synchronous>, transform_indices = @transform_1, window_bounds = array<i64: 3, 32>}, {transform_indices = @transform_2, window_bounds = array<i64: 1, 1, 32>}, {transform_indices = @transform_3, window_bounds = array<i64: 1, 512, 32>}]} {
    %c0 = arith.constant 0 : index
    %c0_0 = arith.constant 0 : index
    %c0_1 = arith.constant 0 : index
    %0 = vector.load %arg2[%c0, %c0_0, %c0_1] : memref<1x512x3xf32, #tpu.memory_space<vmem>>, vector<1x512x3xf32>
    %1 = vector.shape_cast %0 : vector<1x512x3xf32> to vector<512x3xf32>
    %c0_2 = arith.constant 0 : index
    %c0_3 = arith.constant 0 : index
    %2 = vector.load %arg3[%c0_2, %c0_3] : memref<3x32xf32, #tpu.memory_space<vmem>>, vector<3x32xf32>
    %cst = arith.constant dense<0.000000e+00> : vector<512x32xf32>
    %3 = tpu.matmul %1, %2, %cst {dimension_numbers = #tpu.dot_dimension_numbers<[1], [0], [0], [1], [0, 0, 1, 1], [], []>} : vector<512x3xf32>, vector<3x32xf32>, vector<512x32xf32> -> vector<512x32xf32>
    %c0_4 = arith.constant 0 : index
    %c0_5 = arith.constant 0 : index
    %c0_6 = arith.constant 0 : index
    %4 = vector.load %arg4[%c0_4, %c0_5, %c0_6] : memref<1x1x32xf32, #tpu.memory_space<vmem>>, vector<1x1x32xf32>
    %5 = vector.shape_cast %4 : vector<1x1x32xf32> to vector<1x32xf32>
    %6 = vector.broadcast %5 : vector<1x32xf32> to vector<512x32xf32>
    %7 = arith.addf %3, %6 : vector<512x32xf32>
    %c0_7 = arith.constant 0 : index
    %c0_8 = arith.constant 0 : index
    %c0_9 = arith.constant 0 : index
    %8 = vector.load %arg5[%c0_7, %c0_8, %c0_9] : memref<1x512x32xf32, #tpu.memory_space<vmem>>, vector<1x512x32xf32>
    %9 = vector.shape_cast %8 : vector<1x512x32xf32> to vector<512x32xf32>
    %10 = vector.shape_cast %7 : vector<512x32xf32> to vector<1x512x32xf32>
    tpu.vector_store %arg5[%c0_7, %c0_8, %c0_9], %10 {strides = array<i32>} : memref<1x512x32xf32, #tpu.memory_space<vmem>>, vector<1x512x32xf32>,
    return
  }
  func.func @transform_0(%arg0: i32, %arg1: i32) -> (i32, i32, i32) {
    %c0_i32 = arith.constant 0 : i32
    %c0_i32_0 = arith.constant 0 : i32
    return %arg0, %arg1, %c0_i32 : i32, i32, i32
  }
  func.func @transform_1(%arg0: i32, %arg1: i32) -> (i32, i32) {
    %c0_i32 = arith.constant 0 : i32
    %c0_i32_0 = arith.constant 0 : i32
    %c0_i32_1 = arith.constant 0 : i32
    return %c0_i32, %c0_i32_0 : i32, i32
  }
  func.func @transform_2(%arg0: i32, %arg1: i32) -> (i32, i32, i32) {
    %c0_i32 = arith.constant 0 : i32
    %c0_i32_0 = arith.constant 0 : i32
    %c0_i32_1 = arith.constant 0 : i32
    return %arg0, %c0_i32, %c0_i32_0 : i32, i32, i32
  }
  func.func @transform_3(%arg0: i32, %arg1: i32) -> (i32, i32, i32) {
    %c0_i32 = arith.constant 0 : i32
    %c0_i32_0 = arith.constant 0 : i32
    return %arg0, %arg1, %c0_i32 : i32, i32, i32
  }
}

</mosaic_0001>

<llo_original>
// kernel: tpu_custom_call.1
$region0: #{tpu_custom_call.1}
  #allocation0 [shape = 'u32[]', space=smem, size = 0x4, offset = 0x4, fixed_abs, tag = 'smem constant byte address 0x4 - core index']
  #allocation1 [shape = 'u32[144,128]{1,0:T(1,128)}', space=vmem, size = 0x12000, scoped, tag = 'internal scratch']
  %s0 = inlined_call_operand.vmem [shape: f32[2,512,3], index: 0, kind: input, shape index: {}]
  %s1 = inlined_call_operand.vmem [shape: f32[3,32], index: 1, kind: input, shape index: {}]
  %s2 = inlined_call_operand.vmem [shape: f32[2,1,32], index: 2, kind: input, shape index: {}]
  %s3 = inlined_call_operand.vmem [shape: f32[2,512,32], index: 3, kind: output, shape index: {}]
  %s4 = sld [smem:[#allocation0]]
  $region45: #{tpu_custom_call.1} parent=0
    _
  %s6 = ssub.s32 1, %s4
  %s7 = scalar_select 0, %s6, %s4
  loop: start=0, step=1, limit=4
  $region2: #{tpu_custom_call.1} parent=0 // loop_pre_header
    _
  $region3: #{tpu_custom_call.1} parent=0 // loop_header
    %s9 = sphi 0, %s13
    %p10 = scmp.ge.s32.totalorder %s9, 4
    %s16 = sphi 0, %s28
    %s17 = sphi 0, %s24
    %s18 = sphi 0, %s16
    %s19 = sphi 0, %s17
    %s20 = sphi 0, %s18
    %s21 = sphi 0, %s19
    %s33 = sphi 0, %s35
    %s36 = sphi 0, %s33
    %s37 = sphi 0, %s36
    %s53 = sphi 0, %s37
    %s57 = sphi 0, %s57
    %s59 = sphi 0, %s57
    %s60 = sphi 0, %s59
    %s74 = sphi 0, %s60
    %s80 = sphi 0, %s82
    %s83 = sphi 0, %s80
    %s84 = sphi 0, %s83
    %s100 = sphi 0, %s84
    %s108 = sphi 0, %s110
    %s111 = sphi 0, %s108
    %s112 = sphi 0, %s111
    %s128 = sphi 0, %s112
  $region4: #{tpu_custom_call.1} parent=0 // loop_header_branch
    %12 = sbr.rel (%p10) target = $region8
  $region5: #{tpu_custom_call.1} parent=0 // loop_body
    %s14 = ssub.s32 %s9, 1
    %s15 = ssub.s32 %s9, 2
    %s22 = sadd.s32 1, %s17
    %p23 = scmp.ge.s32.totalorder %s22, 1
    %s24 = scalar_select %p23, 0, %s22
    %s25 = sadd.s32 1, %s16
    %s26 = scalar_select %p23, %s25, %s16
    %p27 = scmp.ge.s32.totalorder %s26, 2
    %s28 = scalar_select %p27, 0, %s26
    %s29 = ssub.s32 %s16, %s28
    %s30 = ssub.s32 %s17, %s24
    %s31 = sor.u32 %s29, %s30
    %p32 = scmp.eq.s32.totalorder %s31, 0
    %s34 = sadd.s32 %s33, 1
    %s35 = scalar_select %p32, %s33, %s34
    %p38 = pneg %p32
    %p39 = scmp.eq.s32.totalorder %s9, 1
    %p40 = por %p38, %p39
    %p41 = scmp.ne.s32.totalorder %s33, %s36
    %p42 = scmp.eq.s32.totalorder %s9, 0
    %p43 = por %p41, %p42
    %p44 = scmp.ne.s32.totalorder %s33, %s36
    %p45 = scmp.eq.s32.totalorder %s14, 1
    %p46 = por %p44, %p45
    %p47 = scmp.ne.s32.totalorder %s36, %s37
    %p48 = scmp.eq.s32.totalorder %s14, 0
    %p49 = por %p47, %p48
    %p50 = scmp.ne.s32.totalorder %s36, %s37
    %p51 = scmp.eq.s32.totalorder %s15, 1
    %p52 = por %p50, %p51
    %p54 = scmp.ne.s32.totalorder %s37, %s53
    %p55 = scmp.eq.s32.totalorder %s15, 0
    %p56 = por %p54, %p55
    %s58 = sadd.s32 %s57, 1
    %p61 = scmp.eq.s32.totalorder %s9, 1
    %p62 = scmp.ne.s32.totalorder %s57, %s59
    %p63 = scmp.eq.s32.totalorder %s9, 0
    %p64 = por %p62, %p63
    %p65 = scmp.ne.s32.totalorder %s57, %s59
    %p66 = scmp.eq.s32.totalorder %s14, 1
    %p67 = por %p65, %p66
    %p68 = scmp.ne.s32.totalorder %s59, %s60
    %p69 = scmp.eq.s32.totalorder %s14, 0
    %p70 = por %p68, %p69
    %p71 = scmp.ne.s32.totalorder %s59, %s60
    %p72 = scmp.eq.s32.totalorder %s15, 1
    %p73 = por %p71, %p72
    %p75 = scmp.ne.s32.totalorder %s60, %s74
    %p76 = scmp.eq.s32.totalorder %s15, 0
    %p77 = por %p75, %p76
    %s78 = ssub.s32 %s16, %s28
    %p79 = scmp.eq.s32.totalorder %s78, 0
    %s81 = sadd.s32 %s80, 1
    %s82 = scalar_select %p79, %s80, %s81
    %p85 = pneg %p79
    %p86 = scmp.eq.s32.totalorder %s9, 1
    %p87 = por %p85, %p86
    %p88 = scmp.ne.s32.totalorder %s80, %s83
    %p89 = scmp.eq.s32.totalorder %s9, 0
    %p90 = por %p88, %p89
    %p91 = scmp.ne.s32.totalorder %s80, %s83
    %p92 = scmp.eq.s32.totalorder %s14, 1
    %p93 = por %p91, %p92
    %p94 = scmp.ne.s32.totalorder %s83, %s84
    %p95 = scmp.eq.s32.totalorder %s14, 0
    %p96 = por %p94, %p95
    %p97 = scmp.ne.s32.totalorder %s83, %s84
    %p98 = scmp.eq.s32.totalorder %s15, 1
    %p99 = por %p97, %p98
    %p101 = scmp.ne.s32.totalorder %s84, %s100
    %p102 = scmp.eq.s32.totalorder %s15, 0
    %p103 = por %p101, %p102
    %s104 = ssub.s32 %s16, %s28
    %s105 = ssub.s32 %s17, %s24
    %s106 = sor.u32 %s104, %s105
    %p107 = scmp.eq.s32.totalorder %s106, 0
    %s109 = sadd.s32 %s108, 1
    %s110 = scalar_select %p107, %s108, %s109
    %p113 = pneg %p107
    %p114 = scmp.eq.s32.totalorder %s9, 1
    %p115 = por %p113, %p114
    %p116 = scmp.ne.s32.totalorder %s108, %s111
    %p117 = scmp.eq.s32.totalorder %s9, 0
    %p118 = por %p116, %p117
    %p119 = scmp.ne.s32.totalorder %s108, %s111
    %p120 = scmp.eq.s32.totalorder %s14, 1
    %p121 = por %p119, %p120
    %p122 = scmp.ne.s32.totalorder %s111, %s112
    %p123 = scmp.eq.s32.totalorder %s14, 0
    %p124 = por %p122, %p123
    %p125 = scmp.ne.s32.totalorder %s111, %s112
    %p126 = scmp.eq.s32.totalorder %s15, 1
    %p127 = por %p125, %p126
    %p129 = scmp.ne.s32.totalorder %s112, %s128
    %p130 = scmp.eq.s32.totalorder %s15, 0
    %p131 = por %p129, %p130
    %p132 = scmp.le.s32.totalorder 1, %s9
    %p133 = scmp.lt.s32.totalorder %s9, 3
    %p134 = pnand %p132, %p133
    %p135 = pneg %p134
    // Predicated region
    $region9: #{tpu_custom_call.1} parent=5 // pred_check
      _
    $region10: #{tpu_custom_call.1} parent=5 // pred_check_branch
      %137 = sbr.rel (%p134) target = $region12
    $region11: #{tpu_custom_call.1} parent=5 // pred_region
      %s138 = ssub.s32 %s9, 1
      // Predicated region
      $region13: #{tpu_custom_call.1} parent=11 // pred_check
        %p139 = pneg %p70
      $region14: #{tpu_custom_call.1} parent=11 // pred_check_branch
        %141 = sbr.rel (%p139) target = $region16
      $region15: #{tpu_custom_call.1} parent=11 // pred_region
        _
      $region16: #{tpu_custom_call.1} parent=11 // pred_fallthru
        _
    $region12: #{tpu_custom_call.1} parent=5 // pred_fallthru
      _
    %p142 = scmp.lt.s32.totalorder %s9, 2
    // Predicated region
    $region17: #{tpu_custom_call.1} parent=5 // pred_check
      %p143 = pneg %p142
    $region18: #{tpu_custom_call.1} parent=5 // pred_check_branch
      %145 = sbr.rel (%p143) target = $region20
    $region19: #{tpu_custom_call.1} parent=5 // pred_region
      // Predicated region
      $region21: #{tpu_custom_call.1} parent=19 // pred_check
        %p146 = pneg %p43
      $region22: #{tpu_custom_call.1} parent=19 // pred_check_branch
        %148 = sbr.rel (%p146) target = $region24
      $region23: #{tpu_custom_call.1} parent=19 // pred_region
        %s149 = smul.u32 64, %s17
        %p150 = scmp.lt.s32.totalorder %s16, 1
        %s151 = scalar_select %p150, %s16, 1
        %p152 = scmp.lt.s32.totalorder %s149, 63
        %s153 = scalar_select %p152, %s149, 63
        %s154 = smul.addr %s151, 64
        %s155 = sadd.s32 %s153, %s154
        %s156 = smul.addr %s155, 8
        %s157 = scalar_lea.vmem %s0, %s156
        %s158 = smul.u32 64, %s17
      $region24: #{tpu_custom_call.1} parent=19 // pred_fallthru
        _
      // Predicated region
      $region25: #{tpu_custom_call.1} parent=19 // pred_check
        %p159 = pneg %p90
      $region26: #{tpu_custom_call.1} parent=19 // pred_check_branch
        %161 = sbr.rel (%p159) target = $region28
      $region27: #{tpu_custom_call.1} parent=19 // pred_region
        %p162 = scmp.lt.s32.totalorder %s16, 1
        %s163 = scalar_select %p162, %s16, 1
        %s164 = scalar_lea.vmem %s2, %s163
      $region28: #{tpu_custom_call.1} parent=19 // pred_fallthru
        _
    $region20: #{tpu_custom_call.1} parent=5 // pred_fallthru
      _
    %p165 = scmp.le.s32.totalorder 1, %s9
    %p166 = scmp.lt.s32.totalorder %s9, 3
    %p167 = pnand %p165, %p166
    %p168 = pneg %p167
    // Predicated region
    $region29: #{tpu_custom_call.1} parent=5 // pred_check
      _
    $region30: #{tpu_custom_call.1} parent=5 // pred_check_branch
      %170 = sbr.rel (%p167) target = $region32
    $region31: #{tpu_custom_call.1} parent=5 // pred_region
      %s171 = ssub.s32 %s9, 1
      %s172 = smul.u32 64, %s19
      %p173 = scmp.lt.s32.totalorder %s18, 1
      %s174 = scalar_select %p173, %s18, 1
      %p175 = scmp.lt.s32.totalorder %s172, 63
      %s176 = scalar_select %p175, %s172, 63
      %s177 = smul.addr %s174, 64
      %s178 = sadd.s32 %s176, %s177
      %s179 = smul.addr %s178, 8
      %s180 = scalar_lea.vmem %s0, %s179
      %p181 = pneg %p49
      %p182 = pneg %p46
      %p183 = pneg %p70
      %p184 = pneg %p67
      %p185 = scmp.lt.s32.totalorder %s18, 1
      %s186 = scalar_select %p185, %s18, 1
      %s187 = scalar_lea.vmem %s2, %s186
      %p188 = pneg %p96
      %p189 = pneg %p93
      %p190 = pneg %p124
      %p191 = pneg %p121
      %s192 = smul.u32 64, %s19
      %p193 = scmp.lt.s32.totalorder %s18, 1
      %s194 = scalar_select %p193, %s18, 1
      %p195 = scmp.lt.s32.totalorder %s192, 63
      %s196 = scalar_select %p195, %s192, 63
      %s197 = smul.addr %s194, 64
      %s198 = sadd.s32 %s196, %s197
      %s199 = smul.addr %s198, 8
      %s200 = scalar_lea.vmem %s3, %s199
      %s201 = smul.u32 64, %s19
      %p202 = scmp.lt.s32.totalorder %s18, 1
      %s203 = scalar_select %p202, %s18, 1
      %p204 = scmp.lt.s32.totalorder %s201, 63
      %s205 = scalar_select %p204, %s201, 63
      %s206 = smul.addr %s203, 64
      %s207 = sadd.s32 %s205, %s206
      %s208 = smul.addr %s207, 8
      %s209 = scalar_lea.vmem %s0, %s208
      %s210 = smul.u32 64, %s19
      %p211 = scmp.lt.s32.totalorder %s18, 1
      %s212 = scalar_select %p211, %s18, 1
      %s213 = scalar_lea.vmem %s2, %s212
      %s214 = smul.u32 64, %s19
      %p215 = scmp.lt.s32.totalorder %s18, 1
      %s216 = scalar_select %p215, %s18, 1
      %p217 = scmp.lt.s32.totalorder %s214, 63
      %s218 = scalar_select %p217, %s214, 63
      %s219 = smul.addr %s216, 64
      %s220 = sadd.s32 %s218, %s219
      %s221 = smul.addr %s220, 8
      %s222 = scalar_lea.vmem %s3, %s221
      %s223 = smul.u32 64, %s19
      %v224 = vld [vmem:[%s209] sm:$0xff]
      %v225 = vld [vmem:[%s209 + $0x8] sm:$0xff]
      %v226 = vld [vmem:[%s209 + $0x10] sm:$0xff]
      %v227 = vld [vmem:[%s209 + $0x18] sm:$0xff]
      %v228 = vld [vmem:[%s209 + $0x20] sm:$0xff]
      %v229 = vld [vmem:[%s209 + $0x28] sm:$0xff]
      %v230 = vld [vmem:[%s209 + $0x30] sm:$0xff]
      %v231 = vld [vmem:[%s209 + $0x38] sm:$0xff]
      %v232 = vld [vmem:[%s209 + $0x40] sm:$0xff]
      %v233 = vld [vmem:[%s209 + $0x48] sm:$0xff]
      %v234 = vld [vmem:[%s209 + $0x50] sm:$0xff]
      %v235 = vld [vmem:[%s209 + $0x58] sm:$0xff]
      %v236 = vld [vmem:[%s209 + $0x60] sm:$0xff]
      %v237 = vld [vmem:[%s209 + $0x68] sm:$0xff]
      %v238 = vld [vmem:[%s209 + $0x70] sm:$0xff]
      %v239 = vld [vmem:[%s209 + $0x78] sm:$0xff]
      %v240 = vld [vmem:[%s209 + $0x80] sm:$0xff]
      %v241 = vld [vmem:[%s209 + $0x88] sm:$0xff]
      %v242 = vld [vmem:[%s209 + $0x90] sm:$0xff]
      %v243 = vld [vmem:[%s209 + $0x98] sm:$0xff]
      %v244 = vld [vmem:[%s209 + $0xa0] sm:$0xff]
      %v245 = vld [vmem:[%s209 + $0xa8] sm:$0xff]
      %v246 = vld [vmem:[%s209 + $0xb0] sm:$0xff]
      %v247 = vld [vmem:[%s209 + $0xb8] sm:$0xff]
      %v248 = vld [vmem:[%s209 + $0xc0] sm:$0xff]
      %v249 = vld [vmem:[%s209 + $0xc8] sm:$0xff]
      %v250 = vld [vmem:[%s209 + $0xd0] sm:$0xff]
      %v251 = vld [vmem:[%s209 + $0xd8] sm:$0xff]
      %v252 = vld [vmem:[%s209 + $0xe0] sm:$0xff]
      %v253 = vld [vmem:[%s209 + $0xe8] sm:$0xff]
      %v254 = vld [vmem:[%s209 + $0xf0] sm:$0xff]
      %v255 = vld [vmem:[%s209 + $0xf8] sm:$0xff]
      %v256 = vld [vmem:[%s209 + $0x100] sm:$0xff]
      %v257 = vld [vmem:[%s209 + $0x108] sm:$0xff]
      %v258 = vld [vmem:[%s209 + $0x110] sm:$0xff]
      %v259 = vld [vmem:[%s209 + $0x118] sm:$0xff]
      %v260 = vld [vmem:[%s209 + $0x120] sm:$0xff]
      %v261 = vld [vmem:[%s209 + $0x128] sm:$0xff]
      %v262 = vld [vmem:[%s209 + $0x130] sm:$0xff]
      %v263 = vld [vmem:[%s209 + $0x138] sm:$0xff]
      %v264 = vld [vmem:[%s209 + $0x140] sm:$0xff]
      %v265 = vld [vmem:[%s209 + $0x148] sm:$0xff]
      %v266 = vld [vmem:[%s209 + $0x150] sm:$0xff]
      %v267 = vld [vmem:[%s209 + $0x158] sm:$0xff]
      %v268 = vld [vmem:[%s209 + $0x160] sm:$0xff]
      %v269 = vld [vmem:[%s209 + $0x168] sm:$0xff]
      %v270 = vld [vmem:[%s209 + $0x170] sm:$0xff]
      %v271 = vld [vmem:[%s209 + $0x178] sm:$0xff]
      %v272 = vld [vmem:[%s209 + $0x180] sm:$0xff]
      %v273 = vld [vmem:[%s209 + $0x188] sm:$0xff]
      %v274 = vld [vmem:[%s209 + $0x190] sm:$0xff]
      %v275 = vld [vmem:[%s209 + $0x198] sm:$0xff]
      %v276 = vld [vmem:[%s209 + $0x1a0] sm:$0xff]
      %v277 = vld [vmem:[%s209 + $0x1a8] sm:$0xff]
      %v278 = vld [vmem:[%s209 + $0x1b0] sm:$0xff]
      %v279 = vld [vmem:[%s209 + $0x1b8] sm:$0xff]
      %v280 = vld [vmem:[%s209 + $0x1c0] sm:$0xff]
      %v281 = vld [vmem:[%s209 + $0x1c8] sm:$0xff]
      %v282 = vld [vmem:[%s209 + $0x1d0] sm:$0xff]
      %v283 = vld [vmem:[%s209 + $0x1d8] sm:$0xff]
      %v284 = vld [vmem:[%s209 + $0x1e0] sm:$0xff]
      %v285 = vld [vmem:[%s209 + $0x1e8] sm:$0xff]
      %v286 = vld [vmem:[%s209 + $0x1f0] sm:$0xff]
      %v287 = vld [vmem:[%s209 + $0x1f8] sm:$0xff]
      %v288 = vld [vmem:[%s1] sm:$0x7]
      %v289 = vld [vmem:[%s213] sm:$0x1]
      %v291 = vlaneseq
      %v292 = vshrl.u32 %v291, 7
      %v293 = vsub.s32 0, %v292
      %v294 = vrot.slane %v289, %v293
      %vm296 = vcmask 23552
      %v298 = vsel %vm296, %v224, 0
      %v301 = vsel %vm296, %v225, 0
      %v304 = vsel %vm296, %v226, 0
      %v307 = vsel %vm296, %v227, 0
      %v310 = vsel %vm296, %v228, 0
      %v313 = vsel %vm296, %v229, 0
      %v316 = vsel %vm296, %v230, 0
      %v319 = vsel %vm296, %v231, 0
      %v322 = vsel %vm296, %v232, 0
      %v325 = vsel %vm296, %v233, 0
      %v328 = vsel %vm296, %v234, 0
      %v331 = vsel %vm296, %v235, 0
      %v334 = vsel %vm296, %v236, 0
      %v337 = vsel %vm296, %v237, 0
      %v340 = vsel %vm296, %v238, 0
      %v343 = vsel %vm296, %v239, 0
      %v346 = vsel %vm296, %v240, 0
      %v349 = vsel %vm296, %v241, 0
      %v352 = vsel %vm296, %v242, 0
      %v355 = vsel %vm296, %v243, 0
      %v358 = vsel %vm296, %v244, 0
      %v361 = vsel %vm296, %v245, 0
      %v364 = vsel %vm296, %v246, 0
      %v367 = vsel %vm296, %v247, 0
      %v370 = vsel %vm296, %v248, 0
      %v373 = vsel %vm296, %v249, 0
      %v376 = vsel %vm296, %v250, 0
      %v379 = vsel %vm296, %v251, 0
      %v382 = vsel %vm296, %v252, 0
      %v385 = vsel %vm296, %v253, 0
      %v388 = vsel %vm296, %v254, 0
      %v391 = vsel %vm296, %v255, 0
      %v394 = vsel %vm296, %v256, 0
      %v397 = vsel %vm296, %v257, 0
      %v400 = vsel %vm296, %v258, 0
      %v403 = vsel %vm296, %v259, 0
      %v406 = vsel %vm296, %v260, 0
      %v409 = vsel %vm296, %v261, 0
      %v412 = vsel %vm296, %v262, 0
      %v415 = vsel %vm296, %v263, 0
      %v418 = vsel %vm296, %v264, 0
      %v421 = vsel %vm296, %v265, 0
      %v424 = vsel %vm296, %v266, 0
      %v427 = vsel %vm296, %v267, 0
      %v430 = vsel %vm296, %v268, 0
      %v433 = vsel %vm296, %v269, 0
      %v436 = vsel %vm296, %v270, 0
      %v439 = vsel %vm296, %v271, 0
      %v442 = vsel %vm296, %v272, 0
      %v445 = vsel %vm296, %v273, 0
      %v448 = vsel %vm296, %v274, 0
      %v451 = vsel %vm296, %v275, 0
      %v454 = vsel %vm296, %v276, 0
      %v457 = vsel %vm296, %v277, 0
      %v460 = vsel %vm296, %v278, 0
      %v463 = vsel %vm296, %v279, 0
      %v466 = vsel %vm296, %v280, 0
      %v469 = vsel %vm296, %v281, 0
      %v472 = vsel %vm296, %v282, 0
      %v475 = vsel %vm296, %v283, 0
      %v478 = vsel %vm296, %v284, 0
      %v481 = vsel %vm296, %v285, 0
      %v484 = vsel %vm296, %v286, 0
      %v487 = vsel %vm296, %v287, 0
      %vm489 = vcmask 1042432
      %v491 = vsel %vm489, %v288, 0
      %493 = vmatprep.subr.mxu0 0.0
      %494 = vmatpush1.msra.mxu0 %v491
      %495 = vmatprep.subr.mxu0 0.0
      %496 = vmatpush1.msra.mxu0 0.0
      %497 = vmatprep.subr.mxu0 0.0
      %498 = vmatpush1.msra.mxu0 0.0
      %499 = vmatprep.subr.mxu0 0.0
      %500 = vmatpush1.msra.mxu0 0.0
      %501 = vmatprep.subr.mxu0 0.0
      %502 = vmatpush1.msra.mxu0 0.0
      %503 = vmatprep.subr.mxu0 0.0
      %504 = vmatpush1.msra.mxu0 0.0
      %505 = vmatprep.subr.mxu0 0.0
      %506 = vmatpush1.msra.mxu0 0.0
      %507 = vmatprep.subr.mxu0 0.0
      %508 = vmatpush1.msra.mxu0 0.0
      %509 = vmatprep.subr.mxu0 0.0
      %510 = vmatpush1.msra.mxu0 0.0
      %511 = vmatprep.subr.mxu0 0.0
      %512 = vmatpush1.msra.mxu0 0.0
      %513 = vmatprep.subr.mxu0 0.0
      %514 = vmatpush1.msra.mxu0 0.0
      %515 = vmatprep.subr.mxu0 0.0
      %516 = vmatpush1.msra.mxu0 0.0
      %517 = vmatprep.subr.mxu0 0.0
      %518 = vmatpush1.msra.mxu0 0.0
      %519 = vmatprep.subr.mxu0 0.0
      %520 = vmatpush1.msra.mxu0 0.0
      %521 = vmatprep.subr.mxu0 0.0
      %522 = vmatpush1.msra.mxu0 0.0
      %523 = vmatprep.subr.mxu0 0.0
      %524 = vmatpush1.msra.mxu0 0.0
      %525 = vmatprep.subr.mxu0 0.0
      %526 = vmatpush1.msra.mxu0 0.0
      %527 = vmatprep.subr.mxu0 0.0
      %528 = vmatpush1.msra.mxu0 0.0
      %529 = vmatprep.subr.mxu0 0.0
      %530 = vmatpush1.msra.mxu0 0.0
      %531 = vmatprep.subr.mxu0 0.0
      %532 = vmatpush1.msra.mxu0 0.0
      %533 = vmatprep.subr.mxu0 0.0
      %534 = vmatpush1.msra.mxu0 0.0
      %535 = vmatprep.subr.mxu0 0.0
      %536 = vmatpush1.msra.mxu0 0.0
      %537 = vmatprep.subr.mxu0 0.0
      %538 = vmatpush1.msra.mxu0 0.0
      %539 = vmatprep.subr.mxu0 0.0
      %540 = vmatpush1.msra.mxu0 0.0
      %541 = vmatprep.subr.mxu0 0.0
      %542 = vmatpush1.msra.mxu0 0.0
      %543 = vmatprep.subr.mxu0 0.0
      %544 = vmatpush1.msra.mxu0 0.0
      %545 = vmatprep.subr.mxu0 0.0
      %546 = vmatpush1.msra.mxu0 0.0
      %547 = vmatprep.subr.mxu0 0.0
      %548 = vmatpush1.msra.mxu0 0.0
      %549 = vmatprep.subr.mxu0 0.0
      %550 = vmatpush1.msra.mxu0 0.0
      %551 = vmatprep.subr.mxu0 0.0
      %552 = vmatpush1.msra.mxu0 0.0
      %553 = vmatprep.subr.mxu0 0.0
      %554 = vmatpush1.msra.mxu0 0.0
      %555 = vmatprep.subr.mxu0 0.0
      %556 = vmatpush1.msra.mxu0 0.0
      %557 = vmatprep.mubr.f32.mxu0 0.0
      %558 = vmatmul.mubr.f32.gmra.mrb[0].mxu0 %v298
      %v559 = vpop.f32.mrb[0].mxu0
      %v560 = vadd.f32 %v294, %v559
      %v561 = vpop.f32.mrb[0].mxu0
      %562 = vmatprep.mubr.f32.mxu0 0.0
      %563 = vmatmul.mubr.f32.gmra.mrb[0].mxu0 %v301
      %v564 = vpop.f32.mrb[0].mxu0
      %v565 = vadd.f32 %v294, %v564
      %v566 = vpop.f32.mrb[0].mxu0
      %567 = vmatprep.mubr.f32.mxu0 0.0
      %568 = vmatmul.mubr.f32.gmra.mrb[0].mxu0 %v304
      %v569 = vpop.f32.mrb[0].mxu0
      %v570 = vadd.f32 %v294, %v569
      %v571 = vpop.f32.mrb[0].mxu0
      %572 = vmatprep.mubr.f32.mxu0 0.0
      %573 = vmatmul.mubr.f32.gmra.mrb[0].mxu0 %v307
      %v574 = vpop.f32.mrb[0].mxu0
      %v575 = vadd.f32 %v294, %v574
      %v576 = vpop.f32.mrb[0].mxu0
      %577 = vmatprep.mubr.f32.mxu0 0.0
      %578 = vmatmul.mubr.f32.gmra.mrb[0].mxu0 %v310
      %v579 = vpop.f32.mrb[0].mxu0
      %v580 = vadd.f32 %v294, %v579
      %v581 = vpop.f32.mrb[0].mxu0
      %582 = vmatprep.mubr.f32.mxu0 0.0
      %583 = vmatmul.mubr.f32.gmra.mrb[0].mxu0 %v313
      %v584 = vpop.f32.mrb[0].mxu0
      %v585 = vadd.f32 %v294, %v584
      %v586 = vpop.f32.mrb[0].mxu0
      %587 = vmatprep.mubr.f32.mxu0 0.0
      %588 = vmatmul.mubr.f32.gmra.mrb[0].mxu0 %v316
      %v589 = vpop.f32.mrb[0].mxu0
      %v590 = vadd.f32 %v294, %v589
      %v591 = vpop.f32.mrb[0].mxu0
      %592 = vmatprep.mubr.f32.mxu0 0.0
      %593 = vmatmul.mubr.f32.gmra.mrb[0].mxu0 %v319
      %v594 = vpop.f32.mrb[0].mxu0
      %v595 = vadd.f32 %v294, %v594
      %v596 = vpop.f32.mrb[0].mxu0
      %597 = vmatprep.mubr.f32.mxu0 0.0
      %598 = vmatmul.mubr.f32.gmra.mrb[0].mxu0 %v322
      %v599 = vpop.f32.mrb[0].mxu0
      %v600 = vadd.f32 %v294, %v599
      %v601 = vpop.f32.mrb[0].mxu0
      %602 = vmatprep.mubr.f32.mxu0 0.0
      %603 = vmatmul.mubr.f32.gmra.mrb[0].mxu0 %v325
      %v604 = vpop.f32.mrb[0].mxu0
      %v605 = vadd.f32 %v294, %v604
      %v606 = vpop.f32.mrb[0].mxu0
      %607 = vmatprep.mubr.f32.mxu0 0.0
      %608 = vmatmul.mubr.f32.gmra.mrb[0].mxu0 %v328
      %v609 = vpop.f32.mrb[0].mxu0
      %v610 = vadd.f32 %v294, %v609
      %v611 = vpop.f32.mrb[0].mxu0
      %612 = vmatprep.mubr.f32.mxu0 0.0
      %613 = vmatmul.mubr.f32.gmra.mrb[0].mxu0 %v331
      %v614 = vpop.f32.mrb[0].mxu0
      %v615 = vadd.f32 %v294, %v614
      %v616 = vpop.f32.mrb[0].mxu0
      %617 = vmatprep.mubr.f32.mxu0 0.0
      %618 = vmatmul.mubr.f32.gmra.mrb[0].mxu0 %v334
      %v619 = vpop.f32.mrb[0].mxu0
      %v620 = vadd.f32 %v294, %v619
      %v621 = vpop.f32.mrb[0].mxu0
      %622 = vmatprep.mubr.f32.mxu0 0.0
      %623 = vmatmul.mubr.f32.gmra.mrb[0].mxu0 %v337
      %v624 = vpop.f32.mrb[0].mxu0
      %v625 = vadd.f32 %v294, %v624
      %v626 = vpop.f32.mrb[0].mxu0
      %627 = vmatprep.mubr.f32.mxu0 0.0
      %628 = vmatmul.mubr.f32.gmra.mrb[0].mxu0 %v340
      %v629 = vpop.f32.mrb[0].mxu0
      %v630 = vadd.f32 %v294, %v629
      %v631 = vpop.f32.mrb[0].mxu0
      %632 = vmatprep.mubr.f32.mxu0 0.0
      %633 = vmatmul.mubr.f32.gmra.mrb[0].mxu0 %v343
      %v634 = vpop.f32.mrb[0].mxu0
      %v635 = vadd.f32 %v294, %v634
      %v636 = vpop.f32.mrb[0].mxu0
      %637 = vmatprep.mubr.f32.mxu0 0.0
      %638 = vmatmul.mubr.f32.gmra.mrb[0].mxu0 %v346
      %v639 = vpop.f32.mrb[0].mxu0
      %v640 = vadd.f32 %v294, %v639
      %v641 = vpop.f32.mrb[0].mxu0
      %642 = vmatprep.mubr.f32.mxu0 0.0
      %643 = vmatmul.mubr.f32.gmra.mrb[0].mxu0 %v349
      %v644 = vpop.f32.mrb[0].mxu0
      %v645 = vadd.f32 %v294, %v644
      %v646 = vpop.f32.mrb[0].mxu0
      %647 = vmatprep.mubr.f32.mxu0 0.0
      %648 = vmatmul.mubr.f32.gmra.mrb[0].mxu0 %v352
      %v649 = vpop.f32.mrb[0].mxu0
      %v650 = vadd.f32 %v294, %v649
      %v651 = vpop.f32.mrb[0].mxu0
      %652 = vmatprep.mubr.f32.mxu0 0.0
      %653 = vmatmul.mubr.f32.gmra.mrb[0].mxu0 %v355
      %v654 = vpop.f32.mrb[0].mxu0
      %v655 = vadd.f32 %v294, %v654
      %v656 = vpop.f32.mrb[0].mxu0
      %657 = vmatprep.mubr.f32.mxu0 0.0
      %658 = vmatmul.mubr.f32.gmra.mrb[0].mxu0 %v358
      %v659 = vpop.f32.mrb[0].mxu0
      %v660 = vadd.f32 %v294, %v659
      %v661 = vpop.f32.mrb[0].mxu0
      %662 = vmatprep.mubr.f32.mxu0 0.0
      %663 = vmatmul.mubr.f32.gmra.mrb[0].mxu0 %v361
      %v664 = vpop.f32.mrb[0].mxu0
      %v665 = vadd.f32 %v294, %v664
      %v666 = vpop.f32.mrb[0].mxu0
      %667 = vmatprep.mubr.f32.mxu0 0.0
      %668 = vmatmul.mubr.f32.gmra.mrb[0].mxu0 %v364
      %v669 = vpop.f32.mrb[0].mxu0
      %v670 = vadd.f32 %v294, %v669
      %v671 = vpop.f32.mrb[0].mxu0
      %672 = vmatprep.mubr.f32.mxu0 0.0
      %673 = vmatmul.mubr.f32.gmra.mrb[0].mxu0 %v367
      %v674 = vpop.f32.mrb[0].mxu0
      %v675 = vadd.f32 %v294, %v674
      %v676 = vpop.f32.mrb[0].mxu0
      %677 = vmatprep.mubr.f32.mxu0 0.0
      %678 = vmatmul.mubr.f32.gmra.mrb[0].mxu0 %v370
      %v679 = vpop.f32.mrb[0].mxu0
      %v680 = vadd.f32 %v294, %v679
      %v681 = vpop.f32.mrb[0].mxu0
      %682 = vmatprep.mubr.f32.mxu0 0.0
      %683 = vmatmul.mubr.f32.gmra.mrb[0].mxu0 %v373
      %v684 = vpop.f32.mrb[0].mxu0
      %v685 = vadd.f32 %v294, %v684
      %v686 = vpop.f32.mrb[0].mxu0
      %687 = vmatprep.mubr.f32.mxu0 0.0
      %688 = vmatmul.mubr.f32.gmra.mrb[0].mxu0 %v376
      %v689 = vpop.f32.mrb[0].mxu0
      %v690 = vadd.f32 %v294, %v689
      %v691 = vpop.f32.mrb[0].mxu0
      %692 = vmatprep.mubr.f32.mxu0 0.0
      %693 = vmatmul.mubr.f32.gmra.mrb[0].mxu0 %v379
      %v694 = vpop.f32.mrb[0].mxu0
      %v695 = vadd.f32 %v294, %v694
      %v696 = vpop.f32.mrb[0].mxu0
      %697 = vmatprep.mubr.f32.mxu0 0.0
      %698 = vmatmul.mubr.f32.gmra.mrb[0].mxu0 %v382
      %v699 = vpop.f32.mrb[0].mxu0
      %v700 = vadd.f32 %v294, %v699
      %v701 = vpop.f32.mrb[0].mxu0
      %702 = vmatprep.mubr.f32.mxu0 0.0
      %703 = vmatmul.mubr.f32.gmra.mrb[0].mxu0 %v385
      %v704 = vpop.f32.mrb[0].mxu0
      %v705 = vadd.f32 %v294, %v704
      %v706 = vpop.f32.mrb[0].mxu0
      %707 = vmatprep.mubr.f32.mxu0 0.0
      %708 = vmatmul.mubr.f32.gmra.mrb[0].mxu0 %v388
      %v709 = vpop.f32.mrb[0].mxu0
      %v710 = vadd.f32 %v294, %v709
      %v711 = vpop.f32.mrb[0].mxu0
      %712 = vmatprep.mubr.f32.mxu0 0.0
      %713 = vmatmul.mubr.f32.gmra.mrb[0].mxu0 %v391
      %v714 = vpop.f32.mrb[0].mxu0
      %v715 = vadd.f32 %v294, %v714
      %v716 = vpop.f32.mrb[0].mxu0
      %717 = vmatprep.mubr.f32.mxu0 0.0
      %718 = vmatmul.mubr.f32.gmra.mrb[0].mxu0 %v394
      %v719 = vpop.f32.mrb[0].mxu0
      %v720 = vadd.f32 %v294, %v719
      %v721 = vpop.f32.mrb[0].mxu0
      %722 = vmatprep.mubr.f32.mxu0 0.0
      %723 = vmatmul.mubr.f32.gmra.mrb[0].mxu0 %v397
      %v724 = vpop.f32.mrb[0].mxu0
      %v725 = vadd.f32 %v294, %v724
      %v726 = vpop.f32.mrb[0].mxu0
      %727 = vmatprep.mubr.f32.mxu0 0.0
      %728 = vmatmul.mubr.f32.gmra.mrb[0].mxu0 %v400
      %v729 = vpop.f32.mrb[0].mxu0
      %v730 = vadd.f32 %v294, %v729
      %v731 = vpop.f32.mrb[0].mxu0
      %732 = vmatprep.mubr.f32.mxu0 0.0
      %733 = vmatmul.mubr.f32.gmra.mrb[0].mxu0 %v403
      %v734 = vpop.f32.mrb[0].mxu0
      %v735 = vadd.f32 %v294, %v734
      %v736 = vpop.f32.mrb[0].mxu0
      %737 = vmatprep.mubr.f32.mxu0 0.0
      %738 = vmatmul.mubr.f32.gmra.mrb[0].mxu0 %v406
      %v739 = vpop.f32.mrb[0].mxu0
      %v740 = vadd.f32 %v294, %v739
      %v741 = vpop.f32.mrb[0].mxu0
      %742 = vmatprep.mubr.f32.mxu0 0.0
      %743 = vmatmul.mubr.f32.gmra.mrb[0].mxu0 %v409
      %v744 = vpop.f32.mrb[0].mxu0
      %v745 = vadd.f32 %v294, %v744
      %v746 = vpop.f32.mrb[0].mxu0
      %747 = vmatprep.mubr.f32.mxu0 0.0
      %748 = vmatmul.mubr.f32.gmra.mrb[0].mxu0 %v412
      %v749 = vpop.f32.mrb[0].mxu0
      %v750 = vadd.f32 %v294, %v749
      %v751 = vpop.f32.mrb[0].mxu0
      %752 = vmatprep.mubr.f32.mxu0 0.0
      %753 = vmatmul.mubr.f32.gmra.mrb[0].mxu0 %v415
      %v754 = vpop.f32.mrb[0].mxu0
      %v755 = vadd.f32 %v294, %v754
      %v756 = vpop.f32.mrb[0].mxu0
      %757 = vmatprep.mubr.f32.mxu0 0.0
      %758 = vmatmul.mubr.f32.gmra.mrb[0].mxu0 %v418
      %v759 = vpop.f32.mrb[0].mxu0
      %v760 = vadd.f32 %v294, %v759
      %v761 = vpop.f32.mrb[0].mxu0
      %762 = vmatprep.mubr.f32.mxu0 0.0
      %763 = vmatmul.mubr.f32.gmra.mrb[0].mxu0 %v421
      %v764 = vpop.f32.mrb[0].mxu0
      %v765 = vadd.f32 %v294, %v764
      %v766 = vpop.f32.mrb[0].mxu0
      %767 = vmatprep.mubr.f32.mxu0 0.0
      %768 = vmatmul.mubr.f32.gmra.mrb[0].mxu0 %v424
      %v769 = vpop.f32.mrb[0].mxu0
      %v770 = vadd.f32 %v294, %v769
      %v771 = vpop.f32.mrb[0].mxu0
      %772 = vmatprep.mubr.f32.mxu0 0.0
      %773 = vmatmul.mubr.f32.gmra.mrb[0].mxu0 %v427
      %v774 = vpop.f32.mrb[0].mxu0
      %v775 = vadd.f32 %v294, %v774
      %v776 = vpop.f32.mrb[0].mxu0
      %777 = vmatprep.mubr.f32.mxu0 0.0
      %778 = vmatmul.mubr.f32.gmra.mrb[0].mxu0 %v430
      %v779 = vpop.f32.mrb[0].mxu0
      %v780 = vadd.f32 %v294, %v779
      %v781 = vpop.f32.mrb[0].mxu0
      %782 = vmatprep.mubr.f32.mxu0 0.0
      %783 = vmatmul.mubr.f32.gmra.mrb[0].mxu0 %v433
      %v784 = vpop.f32.mrb[0].mxu0
      %v785 = vadd.f32 %v294, %v784
      %v786 = vpop.f32.mrb[0].mxu0
      %787 = vmatprep.mubr.f32.mxu0 0.0
      %788 = vmatmul.mubr.f32.gmra.mrb[0].mxu0 %v436
      %v789 = vpop.f32.mrb[0].mxu0
      %v790 = vadd.f32 %v294, %v789
      %v791 = vpop.f32.mrb[0].mxu0
      %792 = vmatprep.mubr.f32.mxu0 0.0
      %793 = vmatmul.mubr.f32.gmra.mrb[0].mxu0 %v439
      %v794 = vpop.f32.mrb[0].mxu0
      %v795 = vadd.f32 %v294, %v794
      %v796 = vpop.f32.mrb[0].mxu0
      %797 = vmatprep.mubr.f32.mxu0 0.0
      %798 = vmatmul.mubr.f32.gmra.mrb[0].mxu0 %v442
      %v799 = vpop.f32.mrb[0].mxu0
      %v800 = vadd.f32 %v294, %v799
      %v801 = vpop.f32.mrb[0].mxu0
      %802 = vmatprep.mubr.f32.mxu0 0.0
      %803 = vmatmul.mubr.f32.gmra.mrb[0].mxu0 %v445
      %v804 = vpop.f32.mrb[0].mxu0
      %v805 = vadd.f32 %v294, %v804
      %v806 = vpop.f32.mrb[0].mxu0
      %807 = vmatprep.mubr.f32.mxu0 0.0
      %808 = vmatmul.mubr.f32.gmra.mrb[0].mxu0 %v448
      %v809 = vpop.f32.mrb[0].mxu0
      %v810 = vadd.f32 %v294, %v809
      %v811 = vpop.f32.mrb[0].mxu0
      %812 = vmatprep.mubr.f32.mxu0 0.0
      %813 = vmatmul.mubr.f32.gmra.mrb[0].mxu0 %v451
      %v814 = vpop.f32.mrb[0].mxu0
      %v815 = vadd.f32 %v294, %v814
      %v816 = vpop.f32.mrb[0].mxu0
      %817 = vmatprep.mubr.f32.mxu0 0.0
      %818 = vmatmul.mubr.f32.gmra.mrb[0].mxu0 %v454
      %v819 = vpop.f32.mrb[0].mxu0
      %v820 = vadd.f32 %v294, %v819
      %v821 = vpop.f32.mrb[0].mxu0
      %822 = vmatprep.mubr.f32.mxu0 0.0
      %823 = vmatmul.mubr.f32.gmra.mrb[0].mxu0 %v457
      %v824 = vpop.f32.mrb[0].mxu0
      %v825 = vadd.f32 %v294, %v824
      %v826 = vpop.f32.mrb[0].mxu0
      %827 = vmatprep.mubr.f32.mxu0 0.0
      %828 = vmatmul.mubr.f32.gmra.mrb[0].mxu0 %v460
      %v829 = vpop.f32.mrb[0].mxu0
      %v830 = vadd.f32 %v294, %v829
      %v831 = vpop.f32.mrb[0].mxu0
      %832 = vmatprep.mubr.f32.mxu0 0.0
      %833 = vmatmul.mubr.f32.gmra.mrb[0].mxu0 %v463
      %v834 = vpop.f32.mrb[0].mxu0
      %v835 = vadd.f32 %v294, %v834
      %v836 = vpop.f32.mrb[0].mxu0
      %837 = vmatprep.mubr.f32.mxu0 0.0
      %838 = vmatmul.mubr.f32.gmra.mrb[0].mxu0 %v466
      %v839 = vpop.f32.mrb[0].mxu0
      %v840 = vadd.f32 %v294, %v839
      %v841 = vpop.f32.mrb[0].mxu0
      %842 = vmatprep.mubr.f32.mxu0 0.0
      %843 = vmatmul.mubr.f32.gmra.mrb[0].mxu0 %v469
      %v844 = vpop.f32.mrb[0].mxu0
      %v845 = vadd.f32 %v294, %v844
      %v846 = vpop.f32.mrb[0].mxu0
      %847 = vmatprep.mubr.f32.mxu0 0.0
      %848 = vmatmul.mubr.f32.gmra.mrb[0].mxu0 %v472
      %v849 = vpop.f32.mrb[0].mxu0
      %v850 = vadd.f32 %v294, %v849
      %v851 = vpop.f32.mrb[0].mxu0
      %852 = vmatprep.mubr.f32.mxu0 0.0
      %853 = vmatmul.mubr.f32.gmra.mrb[0].mxu0 %v475
      %v854 = vpop.f32.mrb[0].mxu0
      %v855 = vadd.f32 %v294, %v854
      %v856 = vpop.f32.mrb[0].mxu0
      %857 = vmatprep.mubr.f32.mxu0 0.0
      %858 = vmatmul.mubr.f32.gmra.mrb[0].mxu0 %v478
      %v859 = vpop.f32.mrb[0].mxu0
      %v860 = vadd.f32 %v294, %v859
      %v861 = vpop.f32.mrb[0].mxu0
      %862 = vmatprep.mubr.f32.mxu0 0.0
      %863 = vmatmul.mubr.f32.gmra.mrb[0].mxu0 %v481
      %v864 = vpop.f32.mrb[0].mxu0
      %v865 = vadd.f32 %v294, %v864
      %v866 = vpop.f32.mrb[0].mxu0
      %867 = vmatprep.mubr.f32.mxu0 0.0
      %868 = vmatmul.mubr.f32.gmra.mrb[0].mxu0 %v484
      %v869 = vpop.f32.mrb[0].mxu0
      %v870 = vadd.f32 %v294, %v869
      %v871 = vpop.f32.mrb[0].mxu0
      %872 = vmatprep.mubr.f32.mxu0 0.0
      %873 = vmatmul.mubr.f32.gmra.mrb[0].mxu0 %v487
      %v874 = vpop.f32.mrb[0].mxu0
      %v875 = vadd.f32 %v294, %v874
      %v876 = vpop.f32.mrb[0].mxu0
      %877 = vdwg.mxu0
      %vm878 = vcmask 261120
      %879 = vst.msk [vmem:[%s222] sm:$0xff] %vm878, %v560
      %880 = vst.msk [vmem:[%s222 + $0x8] sm:$0xff] %vm878, %v565
      %881 = vst.msk [vmem:[%s222 + $0x10] sm:$0xff] %vm878, %v570
      %882 = vst.msk [vmem:[%s222 + $0x18] sm:$0xff] %vm878, %v575
      %883 = vst.msk [vmem:[%s222 + $0x20] sm:$0xff] %vm878, %v580
      %884 = vst.msk [vmem:[%s222 + $0x28] sm:$0xff] %vm878, %v585
      %885 = vst.msk [vmem:[%s222 + $0x30] sm:$0xff] %vm878, %v590
      %886 = vst.msk [vmem:[%s222 + $0x38] sm:$0xff] %vm878, %v595
      %887 = vst.msk [vmem:[%s222 + $0x40] sm:$0xff] %vm878, %v600
      %888 = vst.msk [vmem:[%s222 + $0x48] sm:$0xff] %vm878, %v605
      %889 = vst.msk [vmem:[%s222 + $0x50] sm:$0xff] %vm878, %v610
      %890 = vst.msk [vmem:[%s222 + $0x58] sm:$0xff] %vm878, %v615
      %891 = vst.msk [vmem:[%s222 + $0x60] sm:$0xff] %vm878, %v620
      %892 = vst.msk [vmem:[%s222 + $0x68] sm:$0xff] %vm878, %v625
      %893 = vst.msk [vmem:[%s222 + $0x70] sm:$0xff] %vm878, %v630
      %894 = vst.msk [vmem:[%s222 + $0x78] sm:$0xff] %vm878, %v635
      %895 = vst.msk [vmem:[%s222 + $0x80] sm:$0xff] %vm878, %v640
      %896 = vst.msk [vmem:[%s222 + $0x88] sm:$0xff] %vm878, %v645
      %897 = vst.msk [vmem:[%s222 + $0x90] sm:$0xff] %vm878, %v650
      %898 = vst.msk [vmem:[%s222 + $0x98] sm:$0xff] %vm878, %v655
      %899 = vst.msk [vmem:[%s222 + $0xa0] sm:$0xff] %vm878, %v660
      %900 = vst.msk [vmem:[%s222 + $0xa8] sm:$0xff] %vm878, %v665
      %901 = vst.msk [vmem:[%s222 + $0xb0] sm:$0xff] %vm878, %v670
      %902 = vst.msk [vmem:[%s222 + $0xb8] sm:$0xff] %vm878, %v675
      %903 = vst.msk [vmem:[%s222 + $0xc0] sm:$0xff] %vm878, %v680
      %904 = vst.msk [vmem:[%s222 + $0xc8] sm:$0xff] %vm878, %v685
      %905 = vst.msk [vmem:[%s222 + $0xd0] sm:$0xff] %vm878, %v690
      %906 = vst.msk [vmem:[%s222 + $0xd8] sm:$0xff] %vm878, %v695
      %907 = vst.msk [vmem:[%s222 + $0xe0] sm:$0xff] %vm878, %v700
      %908 = vst.msk [vmem:[%s222 + $0xe8] sm:$0xff] %vm878, %v705
      %909 = vst.msk [vmem:[%s222 + $0xf0] sm:$0xff] %vm878, %v710
      %910 = vst.msk [vmem:[%s222 + $0xf8] sm:$0xff] %vm878, %v715
      %911 = vst.msk [vmem:[%s222 + $0x100] sm:$0xff] %vm878, %v720
      %912 = vst.msk [vmem:[%s222 + $0x108] sm:$0xff] %vm878, %v725
      %913 = vst.msk [vmem:[%s222 + $0x110] sm:$0xff] %vm878, %v730
      %914 = vst.msk [vmem:[%s222 + $0x118] sm:$0xff] %vm878, %v735
      %915 = vst.msk [vmem:[%s222 + $0x120] sm:$0xff] %vm878, %v740
      %916 = vst.msk [vmem:[%s222 + $0x128] sm:$0xff] %vm878, %v745
      %917 = vst.msk [vmem:[%s222 + $0x130] sm:$0xff] %vm878, %v750
      %918 = vst.msk [vmem:[%s222 + $0x138] sm:$0xff] %vm878, %v755
      %919 = vst.msk [vmem:[%s222 + $0x140] sm:$0xff] %vm878, %v760
      %920 = vst.msk [vmem:[%s222 + $0x148] sm:$0xff] %vm878, %v765
      %921 = vst.msk [vmem:[%s222 + $0x150] sm:$0xff] %vm878, %v770
      %922 = vst.msk [vmem:[%s222 + $0x158] sm:$0xff] %vm878, %v775
      %923 = vst.msk [vmem:[%s222 + $0x160] sm:$0xff] %vm878, %v780
      %924 = vst.msk [vmem:[%s222 + $0x168] sm:$0xff] %vm878, %v785
      %925 = vst.msk [vmem:[%s222 + $0x170] sm:$0xff] %vm878, %v790
      %926 = vst.msk [vmem:[%s222 + $0x178] sm:$0xff] %vm878, %v795
      %927 = vst.msk [vmem:[%s222 + $0x180] sm:$0xff] %vm878, %v800
      %928 = vst.msk [vmem:[%s222 + $0x188] sm:$0xff] %vm878, %v805
      %929 = vst.msk [vmem:[%s222 + $0x190] sm:$0xff] %vm878, %v810
      %930 = vst.msk [vmem:[%s222 + $0x198] sm:$0xff] %vm878, %v815
      %931 = vst.msk [vmem:[%s222 + $0x1a0] sm:$0xff] %vm878, %v820
      %932 = vst.msk [vmem:[%s222 + $0x1a8] sm:$0xff] %vm878, %v825
      %933 = vst.msk [vmem:[%s222 + $0x1b0] sm:$0xff] %vm878, %v830
      %934 = vst.msk [vmem:[%s222 + $0x1b8] sm:$0xff] %vm878, %v835
      %935 = vst.msk [vmem:[%s222 + $0x1c0] sm:$0xff] %vm878, %v840
      %936 = vst.msk [vmem:[%s222 + $0x1c8] sm:$0xff] %vm878, %v845
      %937 = vst.msk [vmem:[%s222 + $0x1d0] sm:$0xff] %vm878, %v850
      %938 = vst.msk [vmem:[%s222 + $0x1d8] sm:$0xff] %vm878, %v855
      %939 = vst.msk [vmem:[%s222 + $0x1e0] sm:$0xff] %vm878, %v860
      %940 = vst.msk [vmem:[%s222 + $0x1e8] sm:$0xff] %vm878, %v865
      %941 = vst.msk [vmem:[%s222 + $0x1f0] sm:$0xff] %vm878, %v870
      %942 = vst.msk [vmem:[%s222 + $0x1f8] sm:$0xff] %vm878, %v875
      %s943 = smul.u32 64, %s19
      %p944 = scmp.lt.s32.totalorder %s18, 1
      %s945 = scalar_select %p944, %s18, 1
      %p946 = scmp.lt.s32.totalorder %s943, 63
      %s947 = scalar_select %p946, %s943, 63
      %s948 = smul.addr %s945, 64
      %s949 = sadd.s32 %s947, %s948
      %s950 = smul.addr %s949, 8
      %s951 = scalar_lea.vmem %s3, %s950
      // Predicated region
      $region33: #{tpu_custom_call.1} parent=31 // pred_check
        %p952 = pneg %p121
      $region34: #{tpu_custom_call.1} parent=31 // pred_check_branch
        %954 = sbr.rel (%p952) target = $region36
      $region35: #{tpu_custom_call.1} parent=31 // pred_region
        %s955 = smul.u32 64, %s19
      $region36: #{tpu_custom_call.1} parent=31 // pred_fallthru
        _
    $region32: #{tpu_custom_call.1} parent=5 // pred_fallthru
      _
    %p956 = scmp.le.s32.totalorder 2, %s9
    // Predicated region
    $region37: #{tpu_custom_call.1} parent=5 // pred_check
      %p957 = pneg %p956
    $region38: #{tpu_custom_call.1} parent=5 // pred_check_branch
      %959 = sbr.rel (%p957) target = $region40
    $region39: #{tpu_custom_call.1} parent=5 // pred_region
      %s960 = ssub.s32 %s9, 2
      // Predicated region
      $region41: #{tpu_custom_call.1} parent=39 // pred_check
        %p961 = pneg %p127
      $region42: #{tpu_custom_call.1} parent=39 // pred_check_branch
        %963 = sbr.rel (%p961) target = $region44
      $region43: #{tpu_custom_call.1} parent=39 // pred_region
        %s964 = smul.u32 64, %s21
        %p965 = scmp.lt.s32.totalorder %s20, 1
        %s966 = scalar_select %p965, %s20, 1
        %p967 = scmp.lt.s32.totalorder %s964, 63
        %s968 = scalar_select %p967, %s964, 63
        %s969 = smul.addr %s966, 64
        %s970 = sadd.s32 %s968, %s969
        %s971 = smul.addr %s970, 8
        %s972 = scalar_lea.vmem %s3, %s971
      $region44: #{tpu_custom_call.1} parent=39 // pred_fallthru
        _
    $region40: #{tpu_custom_call.1} parent=5 // pred_fallthru
      _
  $region6: #{tpu_custom_call.1} parent=0 // loop_footer
    %s13 = sadd.s32 1, %s9
  $region7: #{tpu_custom_call.1} parent=0 // loop_footer_branch
    %8 = sbr.rel target = $region3
  $region8: #{tpu_custom_call.1} parent=0 // loop_exit
    _

</llo_original>
